<compile_context>
chip_gen: v6e
topology: v6e:2x2x1
jax: 0.10.0
libtpu: 0.0.40
codegen_flags: <defaults>
</compile_context>

<pallas_src>
import functools

import jax
import jax.numpy as jnp
from jax.experimental import pallas as pl
from jax.experimental.pallas import tpu as pltpu

NUM_PARTS = [1, 2]                            # default num_parts of DBN
NUM_HEADS = sum(NUM_PARTS) + len(NUM_PARTS)   # = 5
BN_EPS = 1e-5


def _round_up(x, m):
    return ((x + m - 1) // m) * m


def _padded_block_bytes(tb, tc, hw, itemsize):
    """True (Mosaic-padded) VMEM footprint of one (tb, tc, hw) input block."""
    sublane_pack = max(8, 32 // max(itemsize, 1))  # 8 for f32, 16 bf16, 32 int8
    return tb * _round_up(tc, sublane_pack) * _round_up(hw, 128) * itemsize


def _device_budget():
    """Generation-aware (vmem_limit_bytes, per_input_block_budget, multi_core)."""
    vmem = None
    try:
        vmem = getattr(pltpu.get_tpu_info(), "vmem_capacity_bytes", None)
    except Exception:
        vmem = None
    if vmem is not None and vmem >= 100 * 1024 * 1024:
        # v5e / v6e: 128 MiB physical VMEM, one TensorCore per chip.
        # Pure HBM streaming kernel -> fewer, larger grid steps.
        return 96 * 1024 * 1024, 12 * 1024 * 1024, False
    # v7x-class (64 MiB physical VMEM, 2 TensorCores) or unknown: conservative.
    return 40 * 1024 * 1024, 4 * 1024 * 1024, True


def _pick_tiles(batch, c, hw, itemsize, block_budget, multi_core):
    """Pick (tb, tc): batch tile and channel tile, using padded footprints."""
    per_img = _padded_block_bytes(1, c, hw, itemsize)
    tb = max(1, min(batch, block_budget // max(per_img, 1)))
    if multi_core and batch >= 2:
        # Keep >= 2 grid steps only on multi-TensorCore chips (v7x) so the
        # "parallel" batch axis actually feeds both cores.
        tb = min(tb, max(1, batch // 2))
    while batch % tb:
        tb -= 1

    tc = c
    if per_img > block_budget:
        # A single image's channels are too big for the budget: split C
        # (pools are per-channel).  tc must divide C and be a multiple of 128
        # so every block (inputs and output) stays lane-dense and legal.
        fitting, divisors = None, []
        for cand in range(128, c, 128):
            if c % cand == 0:
                divisors.append(cand)
                if _padded_block_bytes(1, cand, hw, itemsize) <= block_budget:
                    fitting = cand            # ascending -> keep largest fit
        if fitting is not None:
            tc = fitting
        elif divisors:
            tc = divisors[0]                  # best effort: smallest divisor
    return tb, tc


def dbn_head_kernel(x1_ref, x2_ref, scale_ref, shift_ref, out_ref, *, split):
    """One grid step: (tb) images x (tc) channels.

    x1_ref / x2_ref   : (tb, tc, HW)  native NCHW layout, H*W on the lane axis.
    scale_ref/shift_ref: (NUM_HEADS, tc) folded eval-mode BatchNorm1d affine.
    out_ref           : (tb, NUM_HEADS, tc).
    split             : ceil(H/2) * W  (torch.chunk's first-chunk extent).
    """
    hw = x1_ref.shape[-1]
    inv_hw = jnp.float32(1.0 / hw)

    x1 = x1_ref[...]                      # native dtype (no full-tensor cast)
    x2 = x2_ref[...]
    x2_top = x2[:, :, :split]             # static slices: no select passes
    x2_bot = x2[:, :, split:]

    # Avg heads: accumulate in f32; avg(x2) reuses the two chunk partial sums.
    avg1 = jnp.sum(x1, axis=-1, dtype=jnp.float32) * inv_hw
    sum_top = jnp.sum(x2_top, axis=-1, dtype=jnp.float32)
    sum_bot = jnp.sum(x2_bot, axis=-1, dtype=jnp.float32)
    avg2 = (sum_top + sum_bot) * inv_hw

    # Max heads: reduce in the native dtype, cast only the tiny pooled result.
    max1 = jnp.max(x1, axis=-1).astype(jnp.float32)
    max2a = jnp.max(x2_top, axis=-1).astype(jnp.float32)
    max2b = jnp.max(x2_bot, axis=-1).astype(jnp.float32)

    # Per-head fused BN affine, written straight into the output block
    # (no concatenate).
    pooled = (avg1, avg2, max1, max2a, max2b)
    for i, p in enumerate(pooled):
        out_ref[:, i, :] = p * scale_ref[i:i + 1, :] + shift_ref[i:i + 1, :]


def dbn_head(x1_nchw, x2_nchw, gamma, beta, running_mean, running_var, eps=BN_EPS):
    """Eval-mode DBN head. x1_nchw / x2_nchw: branch feature maps, NCHW.

    Returns bn_list: NUM_HEADS arrays of shape [B, C] (matching DBN.forward's
    eval-mode return value)."""
    B, C, H, W = x1_nchw.shape
    assert x2_nchw.shape == (B, C, H, W)
    # torch.chunk(x2, chunks=2, dim=2) needs H >= 2 (otherwise the PyTorch
    # forward itself would index out of range).
    assert H >= NUM_PARTS[1], "DBN head requires H >= num_parts[1] rows"

    HW = H * W
    split = ((H + 1) // 2) * W            # torch.chunk: ceil(H/2) rows first

    # Free reshape (collapses contiguous trailing dims) — no transpose, no
    # dtype conversion; inputs keep their native dtype through the call.
    x1 = x1_nchw.reshape(B, C, HW)
    x2 = x2_nchw.reshape(B, C, HW)

    # Fold eval BatchNorm1d into a per-head affine (tiny, plain-JAX glue):
    #   y = gamma * (x - running_mean) / sqrt(running_var + eps) + beta
    scale = (gamma.astype(jnp.float32)
             * jax.lax.rsqrt(running_var.astype(jnp.float32) + eps))
    shift = beta.astype(jnp.float32) - running_mean.astype(jnp.float32) * scale
    scale = scale.reshape(NUM_HEADS, C)
    shift = shift.reshape(NUM_HEADS, C)

    itemsize = jnp.dtype(x1.dtype).itemsize
    vmem_limit, block_budget, multi_core = _device_budget()
    tb, tc = _pick_tiles(B, C, HW, itemsize, block_budget, multi_core)
    grid = (B // tb, C // tc)

    kernel = functools.partial(dbn_head_kernel, split=split)
    out = pl.pallas_call(
        kernel,
        out_shape=jax.ShapeDtypeStruct((B, NUM_HEADS, C), jnp.float32),
        grid=grid,
        in_specs=[
            pl.BlockSpec((tb, tc, HW), lambda b, c: (b, c, 0)),
            pl.BlockSpec((tb, tc, HW), lambda b, c: (b, c, 0)),
            pl.BlockSpec((NUM_HEADS, tc), lambda b, c: (0, c)),
            pl.BlockSpec((NUM_HEADS, tc), lambda b, c: (0, c)),
        ],
        out_specs=pl.BlockSpec((tb, NUM_HEADS, tc), lambda b, c: (b, 0, c)),
        compiler_params=pltpu.CompilerParams(
            dimension_semantics=("parallel", "parallel"),
            vmem_limit_bytes=vmem_limit,
        ),
    )(x1, x2, scale, shift)

    # Contiguous per-head slices.
    return [out[:, i, :] for i in range(NUM_HEADS)]


def dbn_head_reference(x1_nchw, x2_nchw, gamma, beta, running_mean, running_var,
                       eps=BN_EPS):
    """Pure-JAX reference mirroring the PyTorch forward (eval mode)."""
    H = x1_nchw.shape[2]
    h0 = (H + 1) // 2                     # torch.chunk: ceil(H/2) rows first
    x1 = x1_nchw.astype(jnp.float32)
    x2 = x2_nchw.astype(jnp.float32)
    x_chunk = [x1, x2, x1, x2[:, :, :h0], x2[:, :, h0:]]
    outs = []
    for i, xc in enumerate(x_chunk):
        if i < len(NUM_PARTS):
            pool = jnp.mean(xc, axis=(2, 3))     # GlobalAvgPool2d(p=1)
        else:
            pool = jnp.max(xc, axis=(2, 3))      # GlobalMaxPool2d(p=1)
        bn = gamma[i] * (pool - running_mean[i]) / jnp.sqrt(running_var[i] + eps) \
            + beta[i]
        outs.append(bn)
    return outs


if __name__ == "__main__":
    # Small synthetic shapes: B=2 images, pool_num (branch channels) C=32, 8x8 map.
    B, C, H, W = 2, 32, 8, 8

    key = jax.random.PRNGKey(0)
    k_x1, k_x2, k_gamma, k_beta = jax.random.split(key, 4)

    # Synthetic branch feature maps (stand-ins for branch_1(x), branch_2(x)), NCHW.
    x1 = jax.random.normal(k_x1, (B, C, H, W), dtype=jnp.float32)
    x2 = jax.random.normal(k_x2, (B, C, H, W), dtype=jnp.float32)

    # BatchNorm1d params per head, matching DBN.__init__ init:
    #   weight ~ N(1.0, std=0.1), bias ~ N(0.0, std=0.1),
    #   running_mean = 0, running_var = 1 (fresh BN buffers).
    std = 0.1
    gamma = 1.0 + std * jax.random.normal(k_gamma, (NUM_HEADS, C), dtype=jnp.float32)
    beta = std * jax.random.normal(k_beta, (NUM_HEADS, C), dtype=jnp.float32)
    running_mean = jnp.zeros((NUM_HEADS, C), dtype=jnp.float32)
    running_var = jnp.ones((NUM_HEADS, C), dtype=jnp.float32)

    bn_list = dbn_head(x1, x2, gamma, beta, running_mean, running_var)
    bn_list = [jax.block_until_ready(b) for b in bn_list]

    ref_list = dbn_head_reference(x1, x2, gamma, beta, running_mean, running_var)
    for got, ref in zip(bn_list, ref_list):
        assert got.shape == (B, C)
        assert jnp.allclose(got, ref, atol=1e-5, rtol=1e-5), \
            f"max err {jnp.max(jnp.abs(got - ref))}"

    print("KERNEL_OK")
</pallas_src>

<mosaic_0001>
module attributes {stable_mosaic.version = 11 : i64} {
  func.func @dbn_head_kernel(%arg0: i32, %arg1: i32, %arg2: memref<1x32x64xf32, #tpu.memory_space<vmem>>, %arg3: memref<1x32x64xf32, #tpu.memory_space<vmem>>, %arg4: memref<5x32xf32, #tpu.memory_space<vmem>>, %arg5: memref<5x32xf32, #tpu.memory_space<vmem>>, %arg6: memref<1x5x32xf32, #tpu.memory_space<vmem>>) attributes {dimension_semantics = [#tpu.dimension_semantics<parallel>, #tpu.dimension_semantics<parallel>], iteration_bounds = array<i64: 2, 1>, scalar_prefetch = 0 : i64, scratch_operands = 0 : i64, tpu.core_type = #tpu.core_type<tc>, window_params = [{transform_indices = @transform_0, window_bounds = array<i64: 1, 32, 64>}, {transform_indices = @transform_1, window_bounds = array<i64: 1, 32, 64>}, {transform_indices = @transform_2, window_bounds = array<i64: 5, 32>}, {transform_indices = @transform_3, window_bounds = array<i64: 5, 32>}, {transform_indices = @transform_4, window_bounds = array<i64: 1, 5, 32>}]} {
    %c0 = arith.constant 0 : index
    %c0_0 = arith.constant 0 : index
    %c0_1 = arith.constant 0 : index
    %0 = vector.load %arg2[%c0, %c0_0, %c0_1] : memref<1x32x64xf32, #tpu.memory_space<vmem>>, vector<1x32x64xf32>
    %c0_2 = arith.constant 0 : index
    %c0_3 = arith.constant 0 : index
    %c0_4 = arith.constant 0 : index
    %1 = vector.load %arg3[%c0_2, %c0_3, %c0_4] : memref<1x32x64xf32, #tpu.memory_space<vmem>>, vector<1x32x64xf32>
    %2 = vector.extract_strided_slice %1 {offsets = [0, 0, 0], sizes = [1, 32, 32], strides = [1, 1, 1]} : vector<1x32x64xf32> to vector<1x32x32xf32>
    %3 = vector.extract_strided_slice %1 {offsets = [0, 0, 32], sizes = [1, 32, 32], strides = [1, 1, 1]} : vector<1x32x64xf32> to vector<1x32x32xf32>
    %cst = arith.constant dense<0.000000e+00> : vector<1x32xf32>
    %4 = vector.multi_reduction <add>, %0, %cst [2] : vector<1x32x64xf32> to vector<1x32xf32>
    %cst_5 = arith.constant 1.562500e-02 : f32
    %5 = vector.broadcast %cst_5 : f32 to vector<1x32xf32>
    %6 = arith.mulf %4, %5 : vector<1x32xf32>
    %cst_6 = arith.constant dense<0.000000e+00> : vector<1x32xf32>
    %7 = vector.multi_reduction <add>, %2, %cst_6 [2] : vector<1x32x32xf32> to vector<1x32xf32>
    %cst_7 = arith.constant dense<0.000000e+00> : vector<1x32xf32>
    %8 = vector.multi_reduction <add>, %3, %cst_7 [2] : vector<1x32x32xf32> to vector<1x32xf32>
    %9 = arith.addf %7, %8 : vector<1x32xf32>
    %cst_8 = arith.constant 1.562500e-02 : f32
    %10 = vector.broadcast %cst_8 : f32 to vector<1x32xf32>
    %11 = arith.mulf %9, %10 : vector<1x32xf32>
    %cst_9 = arith.constant dense<0xFF800000> : vector<1x32xf32>
    %12 = vector.multi_reduction <maximumf>, %0, %cst_9 [2] : vector<1x32x64xf32> to vector<1x32xf32>
    %cst_10 = arith.constant dense<0xFF800000> : vector<1x32xf32>
    %13 = vector.multi_reduction <maximumf>, %2, %cst_10 [2] : vector<1x32x32xf32> to vector<1x32xf32>
    %cst_11 = arith.constant dense<0xFF800000> : vector<1x32xf32>
    %14 = vector.multi_reduction <maximumf>, %3, %cst_11 [2] : vector<1x32x32xf32> to vector<1x32xf32>
    %c0_12 = arith.constant 0 : index
    %c0_13 = arith.constant 0 : index
    %15 = vector.load %arg4[%c0_12, %c0_13] : memref<5x32xf32, #tpu.memory_space<vmem>>, vector<1x32xf32>
    %16 = arith.mulf %6, %15 : vector<1x32xf32>
    %c0_14 = arith.constant 0 : index
    %c0_15 = arith.constant 0 : index
    %17 = vector.load %arg5[%c0_14, %c0_15] : memref<5x32xf32, #tpu.memory_space<vmem>>, vector<1x32xf32>
    %18 = arith.addf %16, %17 : vector<1x32xf32>
    %c0_16 = arith.constant 0 : index
    %c0_17 = arith.constant 0 : index
    %c0_18 = arith.constant 0 : index
    %19 = vector.load %arg6[%c0_16, %c0_17, %c0_18] : memref<1x5x32xf32, #tpu.memory_space<vmem>>, vector<1x1x32xf32>
    %20 = vector.shape_cast %19 : vector<1x1x32xf32> to vector<1x32xf32>
    %21 = vector.shape_cast %18 : vector<1x32xf32> to vector<1x1x32xf32>
    tpu.vector_store %arg6[%c0_16, %c0_17, %c0_18], %21 {strides = array<i32>} : memref<1x5x32xf32, #tpu.memory_space<vmem>>, vector<1x1x32xf32>,
    %c1 = arith.constant 1 : index
    %c0_19 = arith.constant 0 : index
    %22 = vector.load %arg4[%c1, %c0_19] : memref<5x32xf32, #tpu.memory_space<vmem>>, vector<1x32xf32>
    %23 = arith.mulf %11, %22 : vector<1x32xf32>
    %c1_20 = arith.constant 1 : index
    %c0_21 = arith.constant 0 : index
    %24 = vector.load %arg5[%c1_20, %c0_21] : memref<5x32xf32, #tpu.memory_space<vmem>>, vector<1x32xf32>
    %25 = arith.addf %23, %24 : vector<1x32xf32>
    %c0_22 = arith.constant 0 : index
    %c1_23 = arith.constant 1 : index
    %c0_24 = arith.constant 0 : index
    %26 = vector.load %arg6[%c0_22, %c1_23, %c0_24] : memref<1x5x32xf32, #tpu.memory_space<vmem>>, vector<1x1x32xf32>
    %27 = vector.shape_cast %26 : vector<1x1x32xf32> to vector<1x32xf32>
    %28 = vector.shape_cast %25 : vector<1x32xf32> to vector<1x1x32xf32>
    tpu.vector_store %arg6[%c0_22, %c1_23, %c0_24], %28 {strides = array<i32>} : memref<1x5x32xf32, #tpu.memory_space<vmem>>, vector<1x1x32xf32>,
    %c2 = arith.constant 2 : index
    %c0_25 = arith.constant 0 : index
    %29 = vector.load %arg4[%c2, %c0_25] : memref<5x32xf32, #tpu.memory_space<vmem>>, vector<1x32xf32>
    %30 = arith.mulf %12, %29 : vector<1x32xf32>
    %c2_26 = arith.constant 2 : index
    %c0_27 = arith.constant 0 : index
    %31 = vector.load %arg5[%c2_26, %c0_27] : memref<5x32xf32, #tpu.memory_space<vmem>>, vector<1x32xf32>
    %32 = arith.addf %30, %31 : vector<1x32xf32>
    %c0_28 = arith.constant 0 : index
    %c2_29 = arith.constant 2 : index
    %c0_30 = arith.constant 0 : index
    %33 = vector.load %arg6[%c0_28, %c2_29, %c0_30] : memref<1x5x32xf32, #tpu.memory_space<vmem>>, vector<1x1x32xf32>
    %34 = vector.shape_cast %33 : vector<1x1x32xf32> to vector<1x32xf32>
    %35 = vector.shape_cast %32 : vector<1x32xf32> to vector<1x1x32xf32>
    tpu.vector_store %arg6[%c0_28, %c2_29, %c0_30], %35 {strides = array<i32>} : memref<1x5x32xf32, #tpu.memory_space<vmem>>, vector<1x1x32xf32>,
    %c3 = arith.constant 3 : index
    %c0_31 = arith.constant 0 : index
    %36 = vector.load %arg4[%c3, %c0_31] : memref<5x32xf32, #tpu.memory_space<vmem>>, vector<1x32xf32>
    %37 = arith.mulf %13, %36 : vector<1x32xf32>
    %c3_32 = arith.constant 3 : index
    %c0_33 = arith.constant 0 : index
    %38 = vector.load %arg5[%c3_32, %c0_33] : memref<5x32xf32, #tpu.memory_space<vmem>>, vector<1x32xf32>
    %39 = arith.addf %37, %38 : vector<1x32xf32>
    %c0_34 = arith.constant 0 : index
    %c3_35 = arith.constant 3 : index
    %c0_36 = arith.constant 0 : index
    %40 = vector.load %arg6[%c0_34, %c3_35, %c0_36] : memref<1x5x32xf32, #tpu.memory_space<vmem>>, vector<1x1x32xf32>
    %41 = vector.shape_cast %40 : vector<1x1x32xf32> to vector<1x32xf32>
    %42 = vector.shape_cast %39 : vector<1x32xf32> to vector<1x1x32xf32>
    tpu.vector_store %arg6[%c0_34, %c3_35, %c0_36], %42 {strides = array<i32>} : memref<1x5x32xf32, #tpu.memory_space<vmem>>, vector<1x1x32xf32>,
    %c4 = arith.constant 4 : index
    %c0_37 = arith.constant 0 : index
    %43 = vector.load %arg4[%c4, %c0_37] : memref<5x32xf32, #tpu.memory_space<vmem>>, vector<1x32xf32>
    %44 = arith.mulf %14, %43 : vector<1x32xf32>
    %c4_38 = arith.constant 4 : index
    %c0_39 = arith.constant 0 : index
    %45 = vector.load %arg5[%c4_38, %c0_39] : memref<5x32xf32, #tpu.memory_space<vmem>>, vector<1x32xf32>
    %46 = arith.addf %44, %45 : vector<1x32xf32>
    %c0_40 = arith.constant 0 : index
    %c4_41 = arith.constant 4 : index
    %c0_42 = arith.constant 0 : index
    %47 = vector.load %arg6[%c0_40, %c4_41, %c0_42] : memref<1x5x32xf32, #tpu.memory_space<vmem>>, vector<1x1x32xf32>
    %48 = vector.shape_cast %47 : vector<1x1x32xf32> to vector<1x32xf32>
    %49 = vector.shape_cast %46 : vector<1x32xf32> to vector<1x1x32xf32>
    tpu.vector_store %arg6[%c0_40, %c4_41, %c0_42], %49 {strides = array<i32>} : memref<1x5x32xf32, #tpu.memory_space<vmem>>, vector<1x1x32xf32>,
    return
  }
  func.func @transform_0(%arg0: i32, %arg1: i32) -> (i32, i32, i32) {
    %c0_i32 = arith.constant 0 : i32
    %c0_i32_0 = arith.constant 0 : i32
    return %arg0, %arg1, %c0_i32 : i32, i32, i32
  }
  func.func @transform_1(%arg0: i32, %arg1: i32) -> (i32, i32, i32) {
    %c0_i32 = arith.constant 0 : i32
    %c0_i32_0 = arith.constant 0 : i32
    return %arg0, %arg1, %c0_i32 : i32, i32, i32
  }
  func.func @transform_2(%arg0: i32, %arg1: i32) -> (i32, i32) {
    %c0_i32 = arith.constant 0 : i32
    %c0_i32_0 = arith.constant 0 : i32
    return %c0_i32, %arg1 : i32, i32
  }
  func.func @transform_3(%arg0: i32, %arg1: i32) -> (i32, i32) {
    %c0_i32 = arith.constant 0 : i32
    %c0_i32_0 = arith.constant 0 : i32
    return %c0_i32, %arg1 : i32, i32
  }
  func.func @transform_4(%arg0: i32, %arg1: i32) -> (i32, i32, i32) {
    %c0_i32 = arith.constant 0 : i32
    %c0_i32_0 = arith.constant 0 : i32
    return %arg0, %c0_i32, %arg1 : i32, i32, i32
  }
}

</mosaic_0001>

<llo_original>
// kernel: tpu_custom_call.1
$region0: #{tpu_custom_call.1}
  #allocation0 [shape = 'u32[]', space=smem, size = 0x4, offset = 0x4, fixed_abs, tag = 'smem constant byte address 0x4 - core index']
  #allocation1 [shape = 'u32[144,128]{1,0:T(1,128)}', space=vmem, size = 0x12000, scoped, tag = 'internal scratch']
  %s0 = inlined_call_operand.hbm [shape: f32[2,32,64], index: 0, kind: input, shape index: {}]
  %s1 = inlined_call_operand.hbm [shape: f32[2,32,64], index: 1, kind: input, shape index: {}]
  %s2 = inlined_call_operand.hbm [shape: f32[5,32], index: 2, kind: input, shape index: {}]
  %s3 = inlined_call_operand.hbm [shape: f32[5,32], index: 3, kind: input, shape index: {}]
  %s4 = inlined_call_operand.vmem [shape: f32[2,5,32], index: 4, kind: output, shape index: {}]
  %s5 = sld [smem:[#allocation0]]
  $region65: #{tpu_custom_call.1} parent=0
    _
  %s7 = ssub.s32 1, %s5
  %s8 = scalar_select 0, %s7, %s5
  $region1: #{tpu_custom_call.1} parent=0
    #allocation2 [shape = 'u8[32768]{0}', space=vmem, size = 0x8000, scoped, tag = 'input window, operand 0']
    #allocation3 [shape = 's32[2]{0}', space=sflag, size = 0x8, scoped, tag = 'scoped memory for tpu_custom_call.1']
    #allocation4 [shape = 'u8[32768]{0}', space=vmem, size = 0x8000, scoped, tag = 'input window, operand 1']
    #allocation5 [shape = 's32[2]{0}', space=sflag, size = 0x8, scoped, tag = 'scoped memory for tpu_custom_call.1']
    #allocation6 [shape = 'u8[4096]{0}', space=vmem, size = 0x1000, scoped, tag = 'input window, operand 2, single buffered']
    #allocation7 [shape = 'u8[4096]{0}', space=vmem, size = 0x1000, scoped, tag = 'input window, operand 3, single buffered']
    #allocation8 [shape = 's32[1]{0}', space=sflag, size = 0x4, scoped, tag = 'scoped memory for tpu_custom_call.1']
    %9 = vsyncpa [#allocation3], 0
    %s10 = scalar_lea.sflag [#allocation3], 1
    %11 = vsyncpa %s10, 0
    %12 = vsyncpa [#allocation5], 0
    %s13 = scalar_lea.sflag [#allocation5], 1
    %14 = vsyncpa %s13, 0
    %15 = vsyncpa [#allocation8], 0
    loop: start=0, step=1, limit=4
    $region2: #{tpu_custom_call.1} parent=1 // loop_pre_header
      _
    $region3: #{tpu_custom_call.1} parent=1 // loop_header
      %s17 = sphi 0, %s21
      %p18 = scmp.ge.s32.totalorder %s17, 4
      %s24 = sphi 0, %s36
      %s25 = sphi 0, %s32
      %s26 = sphi 0, %s24
      %s27 = sphi 0, %s25
      %s28 = sphi 0, %s26
      %s29 = sphi 0, %s27
      %s41 = sphi 0, %s43
      %s44 = sphi 0, %s41
      %s45 = sphi 0, %s44
      %s61 = sphi 0, %s45
      %s69 = sphi 0, %s71
      %s72 = sphi 0, %s69
      %s73 = sphi 0, %s72
      %s89 = sphi 0, %s73
      %s95 = sphi 0, %s97
      %s98 = sphi 0, %s95
      %s99 = sphi 0, %s98
      %s115 = sphi 0, %s99
      %s121 = sphi 0, %s123
      %s124 = sphi 0, %s121
      %s125 = sphi 0, %s124
      %s141 = sphi 0, %s125
      %s149 = sphi 0, %s151
      %s152 = sphi 0, %s149
      %s153 = sphi 0, %s152
      %s169 = sphi 0, %s153
    $region4: #{tpu_custom_call.1} parent=1 // loop_header_branch
      %20 = sbr.rel (%p18) target = $region8
    $region5: #{tpu_custom_call.1} parent=1 // loop_body
      %s22 = ssub.s32 %s17, 1
      %s23 = ssub.s32 %s17, 2
      %s30 = sadd.s32 1, %s25
      %p31 = scmp.ge.s32.totalorder %s30, 1
      %s32 = scalar_select %p31, 0, %s30
      %s33 = sadd.s32 1, %s24
      %s34 = scalar_select %p31, %s33, %s24
      %p35 = scmp.ge.s32.totalorder %s34, 2
      %s36 = scalar_select %p35, 0, %s34
      %s37 = ssub.s32 %s24, %s36
      %s38 = ssub.s32 %s25, %s32
      %s39 = sor.u32 %s37, %s38
      %p40 = scmp.eq.s32.totalorder %s39, 0
      %s42 = sadd.s32 %s41, 1
      %s43 = scalar_select %p40, %s41, %s42
      %p46 = pneg %p40
      %p47 = scmp.eq.s32.totalorder %s17, 1
      %p48 = por %p46, %p47
      %p49 = scmp.ne.s32.totalorder %s41, %s44
      %p50 = scmp.eq.s32.totalorder %s17, 0
      %p51 = por %p49, %p50
      %p52 = scmp.ne.s32.totalorder %s41, %s44
      %p53 = scmp.eq.s32.totalorder %s22, 1
      %p54 = por %p52, %p53
      %p55 = scmp.ne.s32.totalorder %s44, %s45
      %p56 = scmp.eq.s32.totalorder %s22, 0
      %p57 = por %p55, %p56
      %p58 = scmp.ne.s32.totalorder %s44, %s45
      %p59 = scmp.eq.s32.totalorder %s23, 1
      %p60 = por %p58, %p59
      %p62 = scmp.ne.s32.totalorder %s45, %s61
      %p63 = scmp.eq.s32.totalorder %s23, 0
      %p64 = por %p62, %p63
      %s65 = ssub.s32 %s24, %s36
      %s66 = ssub.s32 %s25, %s32
      %s67 = sor.u32 %s65, %s66
      %p68 = scmp.eq.s32.totalorder %s67, 0
      %s70 = sadd.s32 %s69, 1
      %s71 = scalar_select %p68, %s69, %s70
      %p74 = pneg %p68
      %p75 = scmp.eq.s32.totalorder %s17, 1
      %p76 = por %p74, %p75
      %p77 = scmp.ne.s32.totalorder %s69, %s72
      %p78 = scmp.eq.s32.totalorder %s17, 0
      %p79 = por %p77, %p78
      %p80 = scmp.ne.s32.totalorder %s69, %s72
      %p81 = scmp.eq.s32.totalorder %s22, 1
      %p82 = por %p80, %p81
      %p83 = scmp.ne.s32.totalorder %s72, %s73
      %p84 = scmp.eq.s32.totalorder %s22, 0
      %p85 = por %p83, %p84
      %p86 = scmp.ne.s32.totalorder %s72, %s73
      %p87 = scmp.eq.s32.totalorder %s23, 1
      %p88 = por %p86, %p87
      %p90 = scmp.ne.s32.totalorder %s73, %s89
      %p91 = scmp.eq.s32.totalorder %s23, 0
      %p92 = por %p90, %p91
      %s93 = ssub.s32 %s25, %s32
      %p94 = scmp.eq.s32.totalorder %s93, 0
      %s96 = sadd.s32 %s95, 1
      %s97 = scalar_select %p94, %s95, %s96
      %p100 = pneg %p94
      %p101 = scmp.eq.s32.totalorder %s17, 1
      %p102 = por %p100, %p101
      %p103 = scmp.ne.s32.totalorder %s95, %s98
      %p104 = scmp.eq.s32.totalorder %s17, 0
      %p105 = por %p103, %p104
      %p106 = scmp.ne.s32.totalorder %s95, %s98
      %p107 = scmp.eq.s32.totalorder %s22, 1
      %p108 = por %p106, %p107
      %p109 = scmp.ne.s32.totalorder %s98, %s99
      %p110 = scmp.eq.s32.totalorder %s22, 0
      %p111 = por %p109, %p110
      %p112 = scmp.ne.s32.totalorder %s98, %s99
      %p113 = scmp.eq.s32.totalorder %s23, 1
      %p114 = por %p112, %p113
      %p116 = scmp.ne.s32.totalorder %s99, %s115
      %p117 = scmp.eq.s32.totalorder %s23, 0
      %p118 = por %p116, %p117
      %s119 = ssub.s32 %s25, %s32
      %p120 = scmp.eq.s32.totalorder %s119, 0
      %s122 = sadd.s32 %s121, 1
      %s123 = scalar_select %p120, %s121, %s122
      %p126 = pneg %p120
      %p127 = scmp.eq.s32.totalorder %s17, 1
      %p128 = por %p126, %p127
      %p129 = scmp.ne.s32.totalorder %s121, %s124
      %p130 = scmp.eq.s32.totalorder %s17, 0
      %p131 = por %p129, %p130
      %p132 = scmp.ne.s32.totalorder %s121, %s124
      %p133 = scmp.eq.s32.totalorder %s22, 1
      %p134 = por %p132, %p133
      %p135 = scmp.ne.s32.totalorder %s124, %s125
      %p136 = scmp.eq.s32.totalorder %s22, 0
      %p137 = por %p135, %p136
      %p138 = scmp.ne.s32.totalorder %s124, %s125
      %p139 = scmp.eq.s32.totalorder %s23, 1
      %p140 = por %p138, %p139
      %p142 = scmp.ne.s32.totalorder %s125, %s141
      %p143 = scmp.eq.s32.totalorder %s23, 0
      %p144 = por %p142, %p143
      %s145 = ssub.s32 %s24, %s36
      %s146 = ssub.s32 %s25, %s32
      %s147 = sor.u32 %s145, %s146
      %p148 = scmp.eq.s32.totalorder %s147, 0
      %s150 = sadd.s32 %s149, 1
      %s151 = scalar_select %p148, %s149, %s150
      %p154 = pneg %p148
      %p155 = scmp.eq.s32.totalorder %s17, 1
      %p156 = por %p154, %p155
      %p157 = scmp.ne.s32.totalorder %s149, %s152
      %p158 = scmp.eq.s32.totalorder %s17, 0
      %p159 = por %p157, %p158
      %p160 = scmp.ne.s32.totalorder %s149, %s152
      %p161 = scmp.eq.s32.totalorder %s22, 1
      %p162 = por %p160, %p161
      %p163 = scmp.ne.s32.totalorder %s152, %s153
      %p164 = scmp.eq.s32.totalorder %s22, 0
      %p165 = por %p163, %p164
      %p166 = scmp.ne.s32.totalorder %s152, %s153
      %p167 = scmp.eq.s32.totalorder %s23, 1
      %p168 = por %p166, %p167
      %p170 = scmp.ne.s32.totalorder %s153, %s169
      %p171 = scmp.eq.s32.totalorder %s23, 0
      %p172 = por %p170, %p171
      %p173 = scmp.le.s32.totalorder 1, %s17
      %p174 = scmp.lt.s32.totalorder %s17, 3
      %p175 = pnand %p173, %p174
      %p176 = pneg %p175
      // Predicated region
      $region9: #{tpu_custom_call.1} parent=5 // pred_check
        _
      $region10: #{tpu_custom_call.1} parent=5 // pred_check_branch
        %178 = sbr.rel (%p175) target = $region12
      $region11: #{tpu_custom_call.1} parent=5 // pred_region
        %s179 = ssub.s32 %s17, 1
        // Predicated region
        $region13: #{tpu_custom_call.1} parent=11 // pred_check
          %p180 = pneg %p111
        $region14: #{tpu_custom_call.1} parent=11 // pred_check_branch
          %182 = sbr.rel (%p180) target = $region16
        $region15: #{tpu_custom_call.1} parent=11 // pred_region
          %s184 = ssub.s32 128, 128
          %185 = vsyncadd [#allocation5], %s184
          %s186 = smul.addr %s27, 128
          %s187 = scalar_lea.hbm %s2, %s186
          %s189 = sshll.u32 [#allocation6], 4
          %s190 = int_to_ptr.vmem [resolvable:$true] %s189
          %192 = dma.hbm_to_vmem [thread:$0]  %s187, 128, %s190, [#allocation5]
        $region16: #{tpu_custom_call.1} parent=11 // pred_fallthru
          _
        // Predicated region
        $region17: #{tpu_custom_call.1} parent=11 // pred_check
          %p193 = pneg %p137
        $region18: #{tpu_custom_call.1} parent=11 // pred_check_branch
          %195 = sbr.rel (%p193) target = $region20
        $region19: #{tpu_custom_call.1} parent=11 // pred_region
          %s197 = ssub.s32 128, 128
          %198 = vsyncadd [#allocation8], %s197
          %s199 = smul.addr %s27, 128
          %s200 = scalar_lea.hbm %s3, %s199
          %s202 = sshll.u32 [#allocation7], 4
          %s203 = int_to_ptr.vmem [resolvable:$true] %s202
          %205 = dma.hbm_to_vmem [thread:$0]  %s200, 128, %s203, [#allocation8]
        $region20: #{tpu_custom_call.1} parent=11 // pred_fallthru
          _
      $region12: #{tpu_custom_call.1} parent=5 // pred_fallthru
        _
      %p206 = scmp.lt.s32.totalorder %s17, 2
      // Predicated region
      $region21: #{tpu_custom_call.1} parent=5 // pred_check
        %p207 = pneg %p206
      $region22: #{tpu_custom_call.1} parent=5 // pred_check_branch
        %209 = sbr.rel (%p207) target = $region24
      $region23: #{tpu_custom_call.1} parent=5 // pred_region
        // Predicated region
        $region25: #{tpu_custom_call.1} parent=23 // pred_check
          %p210 = pneg %p51
        $region26: #{tpu_custom_call.1} parent=23 // pred_check_branch
          %212 = sbr.rel (%p210) target = $region28
        $region27: #{tpu_custom_call.1} parent=23 // pred_region
          %s213 = sand.u32 %s41, 1
          %s214 = scalar_lea.sflag [#allocation3], %s213
          %s215 = sand.u32 %s41, 1
          %s216 = smul.addr %s215, 32
          %s217 = scalar_lea.vmem [#allocation2], %s216
          %s218 = smul.u32 4, %s25
          %s220 = ssub.s32 512, 512
          %221 = vsyncadd %s214, %s220
          %s222 = smul.addr %s24, 4
          %s223 = sadd.s32 %s218, %s222
          %s224 = smul.addr %s223, 128
          %s225 = scalar_lea.hbm %s0, %s224
          %s226 = sshll.u32 %s217, 4
          %s227 = int_to_ptr.vmem [resolvable:$true] %s226
          %232 = dma.hbm_to_vmem [thread:$0]  %s225, 512, %s227, %s214, 128, 128, 8
        $region28: #{tpu_custom_call.1} parent=23 // pred_fallthru
          _
        // Predicated region
        $region29: #{tpu_custom_call.1} parent=23 // pred_check
          %p233 = pneg %p79
        $region30: #{tpu_custom_call.1} parent=23 // pred_check_branch
          %235 = sbr.rel (%p233) target = $region32
        $region31: #{tpu_custom_call.1} parent=23 // pred_region
          %s236 = sand.u32 %s17, 1
          %s237 = scalar_lea.sflag [#allocation5], %s236
          %s238 = sand.u32 %s69, 1
          %s239 = smul.addr %s238, 32
          %s240 = scalar_lea.vmem [#allocation4], %s239
          %s241 = smul.u32 4, %s25
          %s243 = ssub.s32 512, 512
          %244 = vsyncadd %s237, %s243
          %s245 = smul.addr %s24, 4
          %s246 = sadd.s32 %s241, %s245
          %s247 = smul.addr %s246, 128
          %s248 = scalar_lea.hbm %s1, %s247
          %s249 = sshll.u32 %s240, 4
          %s250 = int_to_ptr.vmem [resolvable:$true] %s249
          %255 = dma.hbm_to_vmem [thread:$0]  %s248, 512, %s250, %s237, 128, 128, 8
        $region32: #{tpu_custom_call.1} parent=23 // pred_fallthru
          _
      $region24: #{tpu_custom_call.1} parent=5 // pred_fallthru
        _
      %p256 = scmp.le.s32.totalorder 1, %s17
      %p257 = scmp.lt.s32.totalorder %s17, 3
      %p258 = pnand %p256, %p257
      %p259 = pneg %p258
      // Predicated region
      $region33: #{tpu_custom_call.1} parent=5 // pred_check
        _
      $region34: #{tpu_custom_call.1} parent=5 // pred_check_branch
        %261 = sbr.rel (%p258) target = $region36
      $region35: #{tpu_custom_call.1} parent=5 // pred_region
        %s262 = ssub.s32 %s17, 1
        %s263 = sand.u32 %s44, 1
        %s264 = scalar_lea.sflag [#allocation3], %s263
        %s265 = sand.u32 %s44, 1
        %s266 = smul.addr %s265, 32
        %s267 = scalar_lea.vmem [#allocation2], %s266
        // Predicated region
        $region37: #{tpu_custom_call.1} parent=35 // pred_check
          %p268 = pneg %p57
        $region38: #{tpu_custom_call.1} parent=35 // pred_check_branch
          %270 = sbr.rel (%p268) target = $region40
        $region39: #{tpu_custom_call.1} parent=35 // pred_region
          %271 = dma.done %s264, 512
        $region40: #{tpu_custom_call.1} parent=35 // pred_fallthru
          _
        %s272 = sand.u32 %s22, 1
        %s273 = scalar_lea.sflag [#allocation5], %s272
        %s274 = sand.u32 %s72, 1
        %s275 = smul.addr %s274, 32
        %s276 = scalar_lea.vmem [#allocation4], %s275
        // Predicated region
        $region41: #{tpu_custom_call.1} parent=35 // pred_check
          %p277 = pneg %p85
        $region42: #{tpu_custom_call.1} parent=35 // pred_check_branch
          %279 = sbr.rel (%p277) target = $region44
        $region43: #{tpu_custom_call.1} parent=35 // pred_region
          %280 = dma.done %s273, 512
        $region44: #{tpu_custom_call.1} parent=35 // pred_fallthru
          _
        // Predicated region
        $region45: #{tpu_custom_call.1} parent=35 // pred_check
          %p281 = pneg %p111
        $region46: #{tpu_custom_call.1} parent=35 // pred_check_branch
          %283 = sbr.rel (%p281) target = $region48
        $region47: #{tpu_custom_call.1} parent=35 // pred_region
          %284 = dma.done [#allocation5], 128
        $region48: #{tpu_custom_call.1} parent=35 // pred_fallthru
          _
        // Predicated region
        $region49: #{tpu_custom_call.1} parent=35 // pred_check
          %p285 = pneg %p137
        $region50: #{tpu_custom_call.1} parent=35 // pred_check_branch
          %287 = sbr.rel (%p285) target = $region52
        $region51: #{tpu_custom_call.1} parent=35 // pred_region
          %288 = dma.done [#allocation8], 128
        $region52: #{tpu_custom_call.1} parent=35 // pred_fallthru
          _
        %s289 = sand.u32 %s44, 1
        %s290 = scalar_lea.sflag [#allocation3], %s289
        %s291 = sand.u32 %s44, 1
        %s292 = smul.addr %s291, 32
        %s293 = scalar_lea.vmem [#allocation2], %s292
        %p294 = pneg %p57
        %p295 = pneg %p54
        %s296 = sand.u32 %s22, 1
        %s297 = scalar_lea.sflag [#allocation5], %s296
        %s298 = sand.u32 %s72, 1
        %s299 = smul.addr %s298, 32
        %s300 = scalar_lea.vmem [#allocation4], %s299
        %p301 = pneg %p85
        %p302 = pneg %p82
        %p303 = pneg %p111
        %p304 = pneg %p108
        %p305 = pneg %p137
        %p306 = pneg %p134
        %p307 = pneg %p165
        %p308 = pneg %p162
        %p309 = scmp.lt.s32.totalorder %s26, 1
        %s310 = scalar_select %p309, %s26, 1
        %p311 = scmp.lt.s32.totalorder %s27, 0
        %s312 = scalar_select %p311, %s27, 0
        %s313 = sadd.s32 %s312, %s310
        %s314 = smul.addr %s313, 8
        %s315 = scalar_lea.vmem %s4, %s314
        %s316 = smul.u32 4, %s27
        %s317 = smul.u32 4, %s27
        %p318 = scmp.lt.s32.totalorder %s26, 1
        %s319 = scalar_select %p318, %s26, 1
        %p320 = scmp.lt.s32.totalorder %s27, 0
        %s321 = scalar_select %p320, %s27, 0
        %s322 = sadd.s32 %s321, %s319
        %s323 = smul.addr %s322, 8
        %s324 = scalar_lea.vmem %s4, %s323
        %v325 = vld [vmem:[%s267] sm:$0xff]
        %v326 = vld [vmem:[%s267 + $0x8] sm:$0xff]
        %v327 = vld [vmem:[%s267 + $0x10] sm:$0xff]
        %v328 = vld [vmem:[%s267 + $0x18] sm:$0xff]
        %v329 = vld [vmem:[%s276] sm:$0xff]
        %v330 = vld [vmem:[%s276 + $0x8] sm:$0xff]
        %v331 = vld [vmem:[%s276 + $0x10] sm:$0xff]
        %v332 = vld [vmem:[%s276 + $0x18] sm:$0xff]
        %vm333 = vcmask 523264
        %v334 = vsel %vm333, %v325, 0.0
        %335 = vadd.xlane.f32.xlu0 %v334
        %v336 = vpop.xlane.xlu0 %335
        %v337 = vsel %vm333, %v326, 0.0
        %338 = vadd.xlane.f32.xlu0 %v337
        %v339 = vpop.xlane.xlu0 %338
        %v340 = vsel %vm333, %v327, 0.0
        %341 = vadd.xlane.f32.xlu0 %v340
        %v342 = vpop.xlane.xlu0 %341
        %v343 = vsel %vm333, %v328, 0.0
        %344 = vadd.xlane.f32.xlu0 %v343
        %v345 = vpop.xlane.xlu0 %344
        %v346 = vmul.f32 %v336, 0.015625
        %v347 = vmul.f32 %v339, 0.015625
        %v348 = vmul.f32 %v342, 0.015625
        %v349 = vmul.f32 %v345, 0.015625
        %vm350 = vcmask 261120
        %v351 = vsel %vm350, %v329, 0.0
        %352 = vadd.xlane.f32.xlu0 %v351
        %v353 = vpop.xlane.xlu0 %352
        %v354 = vsel %vm350, %v330, 0.0
        %355 = vadd.xlane.f32.xlu0 %v354
        %v356 = vpop.xlane.xlu0 %355
        %v357 = vsel %vm350, %v331, 0.0
        %358 = vadd.xlane.f32.xlu0 %v357
        %v359 = vpop.xlane.xlu0 %358
        %v360 = vsel %vm350, %v332, 0.0
        %361 = vadd.xlane.f32.xlu0 %v360
        %v362 = vpop.xlane.xlu0 %361
        %367 = vrot.lane.b32.xlu0 %v329, 96
        %v368 = vpop.permute.xlu0 %367
        %369 = vrot.lane.b32.xlu0 %v330, 96
        %v370 = vpop.permute.xlu0 %369
        %371 = vrot.lane.b32.xlu0 %v331, 96
        %v372 = vpop.permute.xlu0 %371
        %373 = vrot.lane.b32.xlu0 %v332, 96
        %v374 = vpop.permute.xlu0 %373
        %v379 = vsel %vm350, %v368, 0.0
        %380 = vadd.xlane.f32.xlu0 %v379
        %v381 = vpop.xlane.xlu0 %380
        %v382 = vsel %vm350, %v370, 0.0
        %383 = vadd.xlane.f32.xlu0 %v382
        %v384 = vpop.xlane.xlu0 %383
        %v385 = vsel %vm350, %v372, 0.0
        %386 = vadd.xlane.f32.xlu0 %v385
        %v387 = vpop.xlane.xlu0 %386
        %v388 = vsel %vm350, %v374, 0.0
        %389 = vadd.xlane.f32.xlu0 %v388
        %v390 = vpop.xlane.xlu0 %389
        %v391 = vadd.f32 %v353, %v381
        %v392 = vadd.f32 %v356, %v384
        %v393 = vadd.f32 %v359, %v387
        %v394 = vadd.f32 %v362, %v390
        %v395 = vmul.f32 %v391, 0.015625
        %v396 = vmul.f32 %v392, 0.015625
        %v397 = vmul.f32 %v393, 0.015625
        %v398 = vmul.f32 %v394, 0.015625
        %v399 = vsel %vm333, %v325, -inf
        %400 = vmax.xlane.f32.xlu0 %v399
        %v401 = vpop.xlane.xlu0 %400
        %v402 = vsel %vm333, %v326, -inf
        %403 = vmax.xlane.f32.xlu0 %v402
        %v404 = vpop.xlane.xlu0 %403
        %v405 = vsel %vm333, %v327, -inf
        %406 = vmax.xlane.f32.xlu0 %v405
        %v407 = vpop.xlane.xlu0 %406
        %v408 = vsel %vm333, %v328, -inf
        %409 = vmax.xlane.f32.xlu0 %v408
        %v410 = vpop.xlane.xlu0 %409
        %v411 = vsel %vm350, %v329, -inf
        %412 = vmax.xlane.f32.xlu0 %v411
        %v413 = vpop.xlane.xlu0 %412
        %v414 = vsel %vm350, %v330, -inf
        %415 = vmax.xlane.f32.xlu0 %v414
        %v416 = vpop.xlane.xlu0 %415
        %v417 = vsel %vm350, %v331, -inf
        %418 = vmax.xlane.f32.xlu0 %v417
        %v419 = vpop.xlane.xlu0 %418
        %v420 = vsel %vm350, %v332, -inf
        %421 = vmax.xlane.f32.xlu0 %v420
        %v422 = vpop.xlane.xlu0 %421
        %vm423 = vcmask 523520
        %v424 = vsel %vm423, %v329, -inf
        %425 = vmax.xlane.f32.xlu0 %v424
        %v426 = vpop.xlane.xlu0 %425
        %v427 = vsel %vm423, %v330, -inf
        %428 = vmax.xlane.f32.xlu0 %v427
        %v429 = vpop.xlane.xlu0 %428
        %v430 = vsel %vm423, %v331, -inf
        %431 = vmax.xlane.f32.xlu0 %v430
        %v432 = vpop.xlane.xlu0 %431
        %v433 = vsel %vm423, %v332, -inf
        %434 = vmax.xlane.f32.xlu0 %v433
        %v435 = vpop.xlane.xlu0 %434
        %v436 = vld [vmem:[#allocation6] sm:$0x1]
        %v438 = vlaneseq
        %v439 = vshrl.u32 %v438, 7
        %v440 = vsub.s32 0, %v439
        %v441 = vrot.slane %v436, %v440
        %443 = vbcast.lane.b32.xlu0 %v441, 256
        %v444 = vpop.permute.xlu0 %443
        %s446 = sor.u32 256, 8
        %447 = vbcast.lane.b32.xlu0 %v441, %s446
        %v448 = vpop.permute.xlu0 %447
        %s450 = sor.u32 256, 16
        %451 = vbcast.lane.b32.xlu0 %v441, %s450
        %v452 = vpop.permute.xlu0 %451
        %s454 = sor.u32 256, 24
        %455 = vbcast.lane.b32.xlu0 %v441, %s454
        %v456 = vpop.permute.xlu0 %455
        %v461 = vmul.f32 %v346, %v444
        %v462 = vmul.f32 %v347, %v448
        %v463 = vmul.f32 %v348, %v452
        %v464 = vmul.f32 %v349, %v456
        %v465 = vld [vmem:[#allocation7] sm:$0x1]
        %v467 = vlaneseq
        %v468 = vshrl.u32 %v467, 7
        %v469 = vsub.s32 0, %v468
        %v470 = vrot.slane %v465, %v469
        %472 = vbcast.lane.b32.xlu0 %v470, 256
        %v473 = vpop.permute.xlu0 %472
        %s475 = sor.u32 256, 8
        %476 = vbcast.lane.b32.xlu0 %v470, %s475
        %v477 = vpop.permute.xlu0 %476
        %s479 = sor.u32 256, 16
        %480 = vbcast.lane.b32.xlu0 %v470, %s479
        %v481 = vpop.permute.xlu0 %480
        %s483 = sor.u32 256, 24
        %484 = vbcast.lane.b32.xlu0 %v470, %s483
        %v485 = vpop.permute.xlu0 %484
        %v490 = vadd.f32 %v461, %v473
        %v491 = vadd.f32 %v462, %v477
        %v492 = vadd.f32 %v463, %v481
        %v493 = vadd.f32 %v464, %v485
        %498 = vset.pattern.permute.xlu0 0
        %499 = vperm.xlu0 %498, %v490
        %v500 = vpop.permute.xlu0 %499
        %501 = vset.pattern.permute.xlu0 0
        %502 = vperm.xlu0 %501, %v491
        %v503 = vpop.permute.xlu0 %502
        %504 = vset.pattern.permute.xlu0 0
        %505 = vperm.xlu0 %504, %v492
        %v506 = vpop.permute.xlu0 %505
        %507 = vset.pattern.permute.xlu0 0
        %508 = vperm.xlu0 %507, %v493
        %v509 = vpop.permute.xlu0 %508
        %v510 = vlaneseq
        %v511 = vand.u32 %v510, 127
        %v512 = vlaneseq
        %v513 = vshrl.u32 %v512, 7
        %v514 = vsub.s32 %v511, %v513
        %v515 = vrot.slane %v500, %v514
        %v516 = vadd.s32 %v511, 4294967288
        %v517 = vlaneseq
        %v518 = vshrl.u32 %v517, 7
        %v519 = vsub.s32 %v516, %v518
        %v520 = vrot.slane %v503, %v519
        %vm521 = vcmask 130112
        %v522 = vsel %vm521, %v520, %v515
        %v523 = vadd.s32 %v511, 4294967280
        %v524 = vlaneseq
        %v525 = vshrl.u32 %v524, 7
        %v526 = vsub.s32 %v523, %v525
        %v527 = vrot.slane %v506, %v526
        %vm528 = vcmask 195712
        %v529 = vsel %vm528, %v527, %v522
        %v530 = vadd.s32 %v511, 4294967272
        %v531 = vlaneseq
        %v532 = vshrl.u32 %v531, 7
        %v533 = vsub.s32 %v530, %v532
        %v534 = vrot.slane %v509, %v533
        %vm535 = vcmask 261312
        %v536 = vsel %vm535, %v534, %v529
        %vm538 = vcmask 253952
        %539 = vst.msk [vmem:[%s324] sm:$0x1] %vm538, %v536
        %v540 = vld [vmem:[#allocation6 + $0x1] sm:$0x1]
        %v542 = vlaneseq
        %v543 = vshrl.u32 %v542, 7
        %v544 = vsub.s32 0, %v543
        %v545 = vrot.slane %v540, %v544
        %547 = vbcast.lane.b32.xlu0 %v545, 256
        %v548 = vpop.permute.xlu0 %547
        %s550 = sor.u32 256, 8
        %551 = vbcast.lane.b32.xlu0 %v545, %s550
        %v552 = vpop.permute.xlu0 %551
        %s554 = sor.u32 256, 16
        %555 = vbcast.lane.b32.xlu0 %v545, %s554
        %v556 = vpop.permute.xlu0 %555
        %s558 = sor.u32 256, 24
        %559 = vbcast.lane.b32.xlu0 %v545, %s558
        %v560 = vpop.permute.xlu0 %559
        %v565 = vmul.f32 %v395, %v548
        %v566 = vmul.f32 %v396, %v552
        %v567 = vmul.f32 %v397, %v556
        %v568 = vmul.f32 %v398, %v560
        %v569 = vld [vmem:[#allocation7 + $0x1] sm:$0x1]
        %v571 = vlaneseq
        %v572 = vshrl.u32 %v571, 7
        %v573 = vsub.s32 0, %v572
        %v574 = vrot.slane %v569, %v573
        %576 = vbcast.lane.b32.xlu0 %v574, 256
        %v577 = vpop.permute.xlu0 %576
        %s579 = sor.u32 256, 8
        %580 = vbcast.lane.b32.xlu0 %v574, %s579
        %v581 = vpop.permute.xlu0 %580
        %s583 = sor.u32 256, 16
        %584 = vbcast.lane.b32.xlu0 %v574, %s583
        %v585 = vpop.permute.xlu0 %584
        %s587 = sor.u32 256, 24
        %588 = vbcast.lane.b32.xlu0 %v574, %s587
        %v589 = vpop.permute.xlu0 %588
        %v594 = vadd.f32 %v565, %v577
        %v595 = vadd.f32 %v566, %v581
        %v596 = vadd.f32 %v567, %v585
        %v597 = vadd.f32 %v568, %v589
        %602 = vset.pattern.permute.xlu0 0
        %603 = vperm.xlu0 %602, %v594
        %v604 = vpop.permute.xlu0 %603
        %605 = vset.pattern.permute.xlu0 0
        %606 = vperm.xlu0 %605, %v595
        %v607 = vpop.permute.xlu0 %606
        %608 = vset.pattern.permute.xlu0 0
        %609 = vperm.xlu0 %608, %v596
        %v610 = vpop.permute.xlu0 %609
        %611 = vset.pattern.permute.xlu0 0
        %612 = vperm.xlu0 %611, %v597
        %v613 = vpop.permute.xlu0 %612
        %v614 = vlaneseq
        %v615 = vshrl.u32 %v614, 7
        %v616 = vsub.s32 %v511, %v615
        %v617 = vrot.slane %v604, %v616
        %v618 = vlaneseq
        %v619 = vshrl.u32 %v618, 7
        %v620 = vsub.s32 %v516, %v619
        %v621 = vrot.slane %v607, %v620
        %v622 = vsel %vm521, %v621, %v617
        %v623 = vlaneseq
        %v624 = vshrl.u32 %v623, 7
        %v625 = vsub.s32 %v523, %v624
        %v626 = vrot.slane %v610, %v625
        %v627 = vsel %vm528, %v626, %v622
        %v628 = vlaneseq
        %v629 = vshrl.u32 %v628, 7
        %v630 = vsub.s32 %v530, %v629
        %v631 = vrot.slane %v613, %v630
        %v632 = vsel %vm535, %v631, %v627
        %634 = vst.msk [vmem:[%s324 + $0x1] sm:$0x1] %vm538, %v632
        %v635 = vld [vmem:[#allocation6 + $0x2] sm:$0x1]
        %v637 = vlaneseq
        %v638 = vshrl.u32 %v637, 7
        %v639 = vsub.s32 0, %v638
        %v640 = vrot.slane %v635, %v639
        %642 = vbcast.lane.b32.xlu0 %v640, 256
        %v643 = vpop.permute.xlu0 %642
        %s645 = sor.u32 256, 8
        %646 = vbcast.lane.b32.xlu0 %v640, %s645
        %v647 = vpop.permute.xlu0 %646
        %s649 = sor.u32 256, 16
        %650 = vbcast.lane.b32.xlu0 %v640, %s649
        %v651 = vpop.permute.xlu0 %650
        %s653 = sor.u32 256, 24
        %654 = vbcast.lane.b32.xlu0 %v640, %s653
        %v655 = vpop.permute.xlu0 %654
        %v660 = vmul.f32 %v401, %v643
        %v661 = vmul.f32 %v404, %v647
        %v662 = vmul.f32 %v407, %v651
        %v663 = vmul.f32 %v410, %v655
        %v664 = vld [vmem:[#allocation7 + $0x2] sm:$0x1]
        %v666 = vlaneseq
        %v667 = vshrl.u32 %v666, 7
        %v668 = vsub.s32 0, %v667
        %v669 = vrot.slane %v664, %v668
        %671 = vbcast.lane.b32.xlu0 %v669, 256
        %v672 = vpop.permute.xlu0 %671
        %s674 = sor.u32 256, 8
        %675 = vbcast.lane.b32.xlu0 %v669, %s674
        %v676 = vpop.permute.xlu0 %675
        %s678 = sor.u32 256, 16
        %679 = vbcast.lane.b32.xlu0 %v669, %s678
        %v680 = vpop.permute.xlu0 %679
        %s682 = sor.u32 256, 24
        %683 = vbcast.lane.b32.xlu0 %v669, %s682
        %v684 = vpop.permute.xlu0 %683
        %v689 = vadd.f32 %v660, %v672
        %v690 = vadd.f32 %v661, %v676
        %v691 = vadd.f32 %v662, %v680
        %v692 = vadd.f32 %v663, %v684
        %697 = vset.pattern.permute.xlu0 0
        %698 = vperm.xlu0 %697, %v689
        %v699 = vpop.permute.xlu0 %698
        %700 = vset.pattern.permute.xlu0 0
        %701 = vperm.xlu0 %700, %v690
        %v702 = vpop.permute.xlu0 %701
        %703 = vset.pattern.permute.xlu0 0
        %704 = vperm.xlu0 %703, %v691
        %v705 = vpop.permute.xlu0 %704
        %706 = vset.pattern.permute.xlu0 0
        %707 = vperm.xlu0 %706, %v692
        %v708 = vpop.permute.xlu0 %707
        %v709 = vlaneseq
        %v710 = vshrl.u32 %v709, 7
        %v711 = vsub.s32 %v511, %v710
        %v712 = vrot.slane %v699, %v711
        %v713 = vlaneseq
        %v714 = vshrl.u32 %v713, 7
        %v715 = vsub.s32 %v516, %v714
        %v716 = vrot.slane %v702, %v715
        %v717 = vsel %vm521, %v716, %v712
        %v718 = vlaneseq
        %v719 = vshrl.u32 %v718, 7
        %v720 = vsub.s32 %v523, %v719
        %v721 = vrot.slane %v705, %v720
        %v722 = vsel %vm528, %v721, %v717
        %v723 = vlaneseq
        %v724 = vshrl.u32 %v723, 7
        %v725 = vsub.s32 %v530, %v724
        %v726 = vrot.slane %v708, %v725
        %v727 = vsel %vm535, %v726, %v722
        %729 = vst.msk [vmem:[%s324 + $0x2] sm:$0x1] %vm538, %v727
        %v730 = vld [vmem:[#allocation6 + $0x3] sm:$0x1]
        %v732 = vlaneseq
        %v733 = vshrl.u32 %v732, 7
        %v734 = vsub.s32 0, %v733
        %v735 = vrot.slane %v730, %v734
        %737 = vbcast.lane.b32.xlu0 %v735, 256
        %v738 = vpop.permute.xlu0 %737
        %s740 = sor.u32 256, 8
        %741 = vbcast.lane.b32.xlu0 %v735, %s740
        %v742 = vpop.permute.xlu0 %741
        %s744 = sor.u32 256, 16
        %745 = vbcast.lane.b32.xlu0 %v735, %s744
        %v746 = vpop.permute.xlu0 %745
        %s748 = sor.u32 256, 24
        %749 = vbcast.lane.b32.xlu0 %v735, %s748
        %v750 = vpop.permute.xlu0 %749
        %v755 = vmul.f32 %v413, %v738
        %v756 = vmul.f32 %v416, %v742
        %v757 = vmul.f32 %v419, %v746
        %v758 = vmul.f32 %v422, %v750
        %v759 = vld [vmem:[#allocation7 + $0x3] sm:$0x1]
        %v761 = vlaneseq
        %v762 = vshrl.u32 %v761, 7
        %v763 = vsub.s32 0, %v762
        %v764 = vrot.slane %v759, %v763
        %766 = vbcast.lane.b32.xlu0 %v764, 256
        %v767 = vpop.permute.xlu0 %766
        %s769 = sor.u32 256, 8
        %770 = vbcast.lane.b32.xlu0 %v764, %s769
        %v771 = vpop.permute.xlu0 %770
        %s773 = sor.u32 256, 16
        %774 = vbcast.lane.b32.xlu0 %v764, %s773
        %v775 = vpop.permute.xlu0 %774
        %s777 = sor.u32 256, 24
        %778 = vbcast.lane.b32.xlu0 %v764, %s777
        %v779 = vpop.permute.xlu0 %778
        %v784 = vadd.f32 %v755, %v767
        %v785 = vadd.f32 %v756, %v771
        %v786 = vadd.f32 %v757, %v775
        %v787 = vadd.f32 %v758, %v779
        %792 = vset.pattern.permute.xlu0 0
        %793 = vperm.xlu0 %792, %v784
        %v794 = vpop.permute.xlu0 %793
        %795 = vset.pattern.permute.xlu0 0
        %796 = vperm.xlu0 %795, %v785
        %v797 = vpop.permute.xlu0 %796
        %798 = vset.pattern.permute.xlu0 0
        %799 = vperm.xlu0 %798, %v786
        %v800 = vpop.permute.xlu0 %799
        %801 = vset.pattern.permute.xlu0 0
        %802 = vperm.xlu0 %801, %v787
        %v803 = vpop.permute.xlu0 %802
        %v804 = vlaneseq
        %v805 = vshrl.u32 %v804, 7
        %v806 = vsub.s32 %v511, %v805
        %v807 = vrot.slane %v794, %v806
        %v808 = vlaneseq
        %v809 = vshrl.u32 %v808, 7
        %v810 = vsub.s32 %v516, %v809
        %v811 = vrot.slane %v797, %v810
        %v812 = vsel %vm521, %v811, %v807
        %v813 = vlaneseq
        %v814 = vshrl.u32 %v813, 7
        %v815 = vsub.s32 %v523, %v814
        %v816 = vrot.slane %v800, %v815
        %v817 = vsel %vm528, %v816, %v812
        %v818 = vlaneseq
        %v819 = vshrl.u32 %v818, 7
        %v820 = vsub.s32 %v530, %v819
        %v821 = vrot.slane %v803, %v820
        %v822 = vsel %vm535, %v821, %v817
        %824 = vst.msk [vmem:[%s324 + $0x3] sm:$0x1] %vm538, %v822
        %v825 = vld [vmem:[#allocation6 + $0x4] sm:$0x1]
        %v827 = vlaneseq
        %v828 = vshrl.u32 %v827, 7
        %v829 = vsub.s32 0, %v828
        %v830 = vrot.slane %v825, %v829
        %832 = vbcast.lane.b32.xlu0 %v830, 256
        %v833 = vpop.permute.xlu0 %832
        %s835 = sor.u32 256, 8
        %836 = vbcast.lane.b32.xlu0 %v830, %s835
        %v837 = vpop.permute.xlu0 %836
        %s839 = sor.u32 256, 16
        %840 = vbcast.lane.b32.xlu0 %v830, %s839
        %v841 = vpop.permute.xlu0 %840
        %s843 = sor.u32 256, 24
        %844 = vbcast.lane.b32.xlu0 %v830, %s843
        %v845 = vpop.permute.xlu0 %844
        %v850 = vmul.f32 %v426, %v833
        %v851 = vmul.f32 %v429, %v837
        %v852 = vmul.f32 %v432, %v841
        %v853 = vmul.f32 %v435, %v845
        %v854 = vld [vmem:[#allocation7 + $0x4] sm:$0x1]
        %v856 = vlaneseq
        %v857 = vshrl.u32 %v856, 7
        %v858 = vsub.s32 0, %v857
        %v859 = vrot.slane %v854, %v858
        %861 = vbcast.lane.b32.xlu0 %v859, 256
        %v862 = vpop.permute.xlu0 %861
        %s864 = sor.u32 256, 8
        %865 = vbcast.lane.b32.xlu0 %v859, %s864
        %v866 = vpop.permute.xlu0 %865
        %s868 = sor.u32 256, 16
        %869 = vbcast.lane.b32.xlu0 %v859, %s868
        %v870 = vpop.permute.xlu0 %869
        %s872 = sor.u32 256, 24
        %873 = vbcast.lane.b32.xlu0 %v859, %s872
        %v874 = vpop.permute.xlu0 %873
        %v879 = vadd.f32 %v850, %v862
        %v880 = vadd.f32 %v851, %v866
        %v881 = vadd.f32 %v852, %v870
        %v882 = vadd.f32 %v853, %v874
        %887 = vset.pattern.permute.xlu0 0
        %888 = vperm.xlu0 %887, %v879
        %v889 = vpop.permute.xlu0 %888
        %890 = vset.pattern.permute.xlu0 0
        %891 = vperm.xlu0 %890, %v880
        %v892 = vpop.permute.xlu0 %891
        %893 = vset.pattern.permute.xlu0 0
        %894 = vperm.xlu0 %893, %v881
        %v895 = vpop.permute.xlu0 %894
        %896 = vset.pattern.permute.xlu0 0
        %897 = vperm.xlu0 %896, %v882
        %v898 = vpop.permute.xlu0 %897
        %v899 = vlaneseq
        %v900 = vshrl.u32 %v899, 7
        %v901 = vsub.s32 %v511, %v900
        %v902 = vrot.slane %v889, %v901
        %v903 = vlaneseq
        %v904 = vshrl.u32 %v903, 7
        %v905 = vsub.s32 %v516, %v904
        %v906 = vrot.slane %v892, %v905
        %v907 = vsel %vm521, %v906, %v902
        %v908 = vlaneseq
        %v909 = vshrl.u32 %v908, 7
        %v910 = vsub.s32 %v523, %v909
        %v911 = vrot.slane %v895, %v910
        %v912 = vsel %vm528, %v911, %v907
        %v913 = vlaneseq
        %v914 = vshrl.u32 %v913, 7
        %v915 = vsub.s32 %v530, %v914
        %v916 = vrot.slane %v898, %v915
        %v917 = vsel %vm535, %v916, %v912
        %919 = vst.msk [vmem:[%s324 + $0x4] sm:$0x1] %vm538, %v917
        %p920 = scmp.lt.s32.totalorder %s26, 1
        %s921 = scalar_select %p920, %s26, 1
        %p922 = scmp.lt.s32.totalorder %s27, 0
        %s923 = scalar_select %p922, %s27, 0
        %s924 = sadd.s32 %s923, %s921
        %s925 = smul.addr %s924, 8
        %s926 = scalar_lea.vmem %s4, %s925
        // Predicated region
        $region53: #{tpu_custom_call.1} parent=35 // pred_check
          %p927 = pneg %p162
        $region54: #{tpu_custom_call.1} parent=35 // pred_check_branch
          %929 = sbr.rel (%p927) target = $region56
        $region55: #{tpu_custom_call.1} parent=35 // pred_region
          _
        $region56: #{tpu_custom_call.1} parent=35 // pred_fallthru
          _
      $region36: #{tpu_custom_call.1} parent=5 // pred_fallthru
        _
      %p930 = scmp.le.s32.totalorder 2, %s17
      // Predicated region
      $region57: #{tpu_custom_call.1} parent=5 // pred_check
        %p931 = pneg %p930
      $region58: #{tpu_custom_call.1} parent=5 // pred_check_branch
        %933 = sbr.rel (%p931) target = $region60
      $region59: #{tpu_custom_call.1} parent=5 // pred_region
        %s934 = ssub.s32 %s17, 2
        // Predicated region
        $region61: #{tpu_custom_call.1} parent=59 // pred_check
          %p935 = pneg %p168
        $region62: #{tpu_custom_call.1} parent=59 // pred_check_branch
          %937 = sbr.rel (%p935) target = $region64
        $region63: #{tpu_custom_call.1} parent=59 // pred_region
          %p938 = scmp.lt.s32.totalorder %s28, 1
          %s939 = scalar_select %p938, %s28, 1
          %p940 = scmp.lt.s32.totalorder %s29, 0
          %s941 = scalar_select %p940, %s29, 0
          %s942 = sadd.s32 %s941, %s939
          %s943 = smul.addr %s942, 8
          %s944 = scalar_lea.vmem %s4, %s943
        $region64: #{tpu_custom_call.1} parent=59 // pred_fallthru
          _
      $region60: #{tpu_custom_call.1} parent=5 // pred_fallthru
        _
    $region6: #{tpu_custom_call.1} parent=1 // loop_footer
      %s21 = sadd.s32 1, %s17
    $region7: #{tpu_custom_call.1} parent=1 // loop_footer_branch
      %16 = sbr.rel target = $region3
    $region8: #{tpu_custom_call.1} parent=1 // loop_exit
      _
    %945 = vsyncpa [#allocation3], 1
    %s946 = scalar_lea.sflag [#allocation3], 1
    %947 = vsyncpa %s946, 1
    %948 = vsyncpa [#allocation5], 1
    %s949 = scalar_lea.sflag [#allocation5], 1
    %950 = vsyncpa %s949, 1
    %951 = vsyncpa [#allocation8], 1

</llo_original>
